<compile_context>
chip_gen: v7x
topology: tpu7x:2x2x1
jax: 0.10.0
libtpu: 0.0.40
codegen_flags: <defaults>
</compile_context>

<pallas_src>
import functools

import jax
import jax.numpy as jnp
from jax.experimental import pallas as pl
from jax.experimental.pallas import tpu as pltpu

_VMEM_LIMIT = 64 * 1024 * 1024


# ----------------------------- Pallas kernels ------------------------------

def _matmul_bn_kernel(x_ref, w_ref, shift_ref, o_ref, *, relu):
    # out = relu?( (x @ w_folded) + shift )   (BN scale pre-folded into w)
    acc = jnp.dot(x_ref[...], w_ref[...], preferred_element_type=jnp.float32)
    acc = acc + shift_ref[...]
    if relu:
        acc = jnp.maximum(acc, 0.0)
    o_ref[...] = acc.astype(o_ref.dtype)


def _matmul_bn_add_relu_kernel(x_ref, w_ref, shift_ref, res_ref, o_ref):
    # out = relu( (x @ w_folded) + shift + residual )
    acc = jnp.dot(x_ref[...], w_ref[...], preferred_element_type=jnp.float32)
    acc = acc + shift_ref[...] + res_ref[...].astype(jnp.float32)
    o_ref[...] = jnp.maximum(acc, 0.0).astype(o_ref.dtype)


def _conv3x3_bn_relu_kernel(x_ref, w_ref, shift_ref, o_ref, *, stride, ho, wo):
    # Direct 3x3 conv: 9-tap reduction in VMEM (no HBM im2col), f32 accumulate.
    # x_ref: (stride*stride, Hs, Ws, Cin) per-parity subgrids of one image.
    cin = x_ref.shape[-1]
    cout = o_ref.shape[-1]
    acc = jnp.zeros((ho * wo, cout), jnp.float32)
    for kh in range(3):
        ph, oh = kh % stride, kh // stride
        for kw in range(3):
            pw, ow = kw % stride, kw // stride
            xt = x_ref[ph * stride + pw, pl.ds(oh, ho), pl.ds(ow, wo), :]
            acc = acc + jnp.dot(xt.reshape(ho * wo, cin), w_ref[kh, kw],
                                preferred_element_type=jnp.float32)
    acc = jnp.maximum(acc + shift_ref[...], 0.0)
    o_ref[...] = acc.reshape(1, ho * wo, cout).astype(o_ref.dtype)


# ----------------------------- Kernel wrappers ------------------------------

def _pick_tm(m):
    # Prefer large (8,128)-aligned row tiles, but keep >=2 grid steps so the
    # "parallel" axis can shard across v7x's two TensorCores and pipeline.
    for tm in (512, 256, 128, 64, 32, 16, 8):
        if m % tm == 0 and m // tm >= 2:
            return tm
    return m


def matmul_bn(x2d, w, shift, *, relu, out_dtype):
    m, k = x2d.shape
    _, n = w.shape
    tm = _pick_tm(m)
    tn = min(n, 512)
    # TODO(synk): add a K grid axis + f32 accumulator scratch if K ever exceeds
    # a few thousand (not needed for ResNet 1x1 convs, K <= 2048).
    return pl.pallas_call(
        functools.partial(_matmul_bn_kernel, relu=relu),
        out_shape=jax.ShapeDtypeStruct((m, n), out_dtype),
        grid=(pl.cdiv(m, tm), pl.cdiv(n, tn)),
        in_specs=[
            pl.BlockSpec((tm, k), lambda i, j: (i, 0)),
            pl.BlockSpec((k, tn), lambda i, j: (0, j)),
            pl.BlockSpec((1, tn), lambda i, j: (0, j)),
        ],
        out_specs=pl.BlockSpec((tm, tn), lambda i, j: (i, j)),
        compiler_params=pltpu.CompilerParams(
            dimension_semantics=("parallel", "parallel"),
            vmem_limit_bytes=_VMEM_LIMIT),
    )(x2d, w, shift)


def matmul_bn_add_relu(x2d, w, shift, res2d, *, out_dtype):
    m, k = x2d.shape
    _, n = w.shape
    tm = _pick_tm(m)
    tn = min(n, 512)
    return pl.pallas_call(
        _matmul_bn_add_relu_kernel,
        out_shape=jax.ShapeDtypeStruct((m, n), out_dtype),
        grid=(pl.cdiv(m, tm), pl.cdiv(n, tn)),
        in_specs=[
            pl.BlockSpec((tm, k), lambda i, j: (i, 0)),
            pl.BlockSpec((k, tn), lambda i, j: (0, j)),
            pl.BlockSpec((1, tn), lambda i, j: (0, j)),
            pl.BlockSpec((tm, tn), lambda i, j: (i, j)),
        ],
        out_specs=pl.BlockSpec((tm, tn), lambda i, j: (i, j)),
        compiler_params=pltpu.CompilerParams(
            dimension_semantics=("parallel", "parallel"),
            vmem_limit_bytes=_VMEM_LIMIT),
    )(x2d, w, shift, res2d)


def conv3x3_bn_relu(taps, w, shift, *, stride, ho, wo, out_dtype):
    # taps: (N*stride*stride, Hs, Ws, Cin) per-parity subgrids; w: (3,3,Cin,Cout)
    nb, hs, ws, cin = taps.shape
    s2 = stride * stride
    n = nb // s2
    cout = w.shape[-1]
    kernel = functools.partial(_conv3x3_bn_relu_kernel,
                               stride=stride, ho=ho, wo=wo)
    return pl.pallas_call(
        kernel,
        out_shape=jax.ShapeDtypeStruct((n, ho * wo, cout), out_dtype),
        grid=(n,),
        in_specs=[
            pl.BlockSpec((s2, hs, ws, cin), lambda b: (b, 0, 0, 0)),
            pl.BlockSpec((3, 3, cin, cout), lambda b: (0, 0, 0, 0)),
            pl.BlockSpec((1, cout), lambda b: (0, 0)),
        ],
        out_specs=pl.BlockSpec((1, ho * wo, cout), lambda b: (b, 0, 0)),
        compiler_params=pltpu.CompilerParams(
            dimension_semantics=("parallel",),
            vmem_limit_bytes=_VMEM_LIMIT),
    )(taps, w, shift)


# ------------------------------- Glue (JAX) --------------------------------

def _round_up(x, m):
    return ((x + m - 1) // m) * m


def _pad_dim(a, axis, target):
    if a.shape[axis] == target:
        return a
    cfg = [(0, 0)] * a.ndim
    cfg[axis] = (0, target - a.shape[axis])
    return jnp.pad(a, cfg)


def fold_bn(w, bn, eps=1e-5):
    # Fold eval-mode BN into the weight (last dim = out channels) + a shift.
    gamma, beta, mean, var = bn
    scale = gamma / jnp.sqrt(var + eps)
    shift = beta - mean * scale
    return w * scale, shift[None, :]


def space_to_taps(xp, stride):
    # Rearrange zero-padded NHWC into per-parity subgrids so the 3x3 strided
    # conv kernel only needs contiguous VMEM slices (single 1x HBM copy).
    n, hp, wp, c = xp.shape
    hs = -(-hp // stride)
    ws = -(-wp // stride)
    taps = []
    for ph in range(stride):
        for pw in range(stride):
            sub = xp[:, ph::stride, pw::stride, :]
            sub = jnp.pad(sub, ((0, 0), (0, hs - sub.shape[1]),
                                (0, ws - sub.shape[2]), (0, 0)))
            taps.append(sub)
    taps = jnp.stack(taps, axis=1)                # (N, s*s, Hs, Ws, C)
    return taps.reshape(n * stride * stride, hs, ws, c)


def bottleneck_forward(x_nchw, params, stride):
    expansion = 4
    n, cin, h, w = x_nchw.shape
    planes = params["conv1_w"].shape[0]
    cout = expansion * planes

    cin_p = _round_up(cin, 128)
    planes_p = _round_up(planes, 128)
    cout_p = _round_up(cout, 128)

    ho = (h - 1) // stride + 1
    wo = (w - 1) // stride + 1

    # NCHW -> NHWC, lane-dense channel padding, bf16 for the MXU.
    # TODO(synk): when chaining blocks, keep activations NHWC/bf16 between
    # blocks and only transpose at network entry/exit.
    x = jnp.transpose(x_nchw, (0, 2, 3, 1))
    x = _pad_dim(x, -1, cin_p).astype(jnp.bfloat16)
    x2d = x.reshape(n * h * w, cin_p)

    # conv1 (1x1) + bn1 + relu
    w1, s1 = fold_bn(jnp.transpose(params["conv1_w"][:, :, 0, 0]), params["bn1"])
    w1 = _pad_dim(_pad_dim(w1, 0, cin_p), 1, planes_p).astype(jnp.bfloat16)
    s1 = _pad_dim(s1, 1, planes_p)
    out = matmul_bn(x2d, w1, s1, relu=True, out_dtype=jnp.bfloat16)

    # conv2 (3x3, stride, pad=1) + bn2 + relu  — direct conv, no HBM im2col.
    w2, s2 = fold_bn(jnp.transpose(params["conv2_w"], (2, 3, 1, 0)), params["bn2"])
    w2 = _pad_dim(_pad_dim(w2, 2, planes_p), 3, planes_p).astype(jnp.bfloat16)
    s2 = _pad_dim(s2, 1, planes_p)
    xp = jnp.pad(out.reshape(n, h, w, planes_p),
                 ((0, 0), (1, 1), (1, 1), (0, 0)))
    taps = space_to_taps(xp, stride)
    out = conv3x3_bn_relu(taps, w2, s2, stride=stride, ho=ho, wo=wo,
                          out_dtype=jnp.bfloat16)
    out2d = out.reshape(n * ho * wo, planes_p)

    # shortcut
    if stride != 1 or cin != cout:
        wsm, ss = fold_bn(jnp.transpose(params["short_w"][:, :, 0, 0]),
                          params["short_bn"])
        wsm = _pad_dim(_pad_dim(wsm, 0, cin_p), 1, cout_p).astype(jnp.bfloat16)
        ss = _pad_dim(ss, 1, cout_p)
        # TODO(synk): the strided subsample is a small XLA slice; it could be
        # folded into the matmul's index_map to save one HBM read.
        x_sub = x[:, ::stride, ::stride, :].reshape(n * ho * wo, cin_p)
        res = matmul_bn(x_sub, wsm, ss, relu=False, out_dtype=jnp.bfloat16)
    else:
        res = x2d  # identity: cin_p == cout_p here

    # conv3 (1x1) + bn3 + residual add + relu (fully fused epilogue)
    w3, s3 = fold_bn(jnp.transpose(params["conv3_w"][:, :, 0, 0]), params["bn3"])
    w3 = _pad_dim(_pad_dim(w3, 0, planes_p), 1, cout_p).astype(jnp.bfloat16)
    s3 = _pad_dim(s3, 1, cout_p)
    out = matmul_bn_add_relu(out2d, w3, s3, res, out_dtype=jnp.float32)

    out = out.reshape(n, ho, wo, cout_p)[:, :, :, :cout]
    return jnp.transpose(out, (0, 3, 1, 2))  # back to NCHW


# ------------------------- Pure-JAX reference check ------------------------

def _ref_conv(x, w, stride, padding):
    return jax.lax.conv_general_dilated(
        x, w, (stride, stride), [(padding, padding)] * 2,
        dimension_numbers=("NCHW", "OIHW", "NCHW"))


def _ref_bn(x, p, eps=1e-5):
    gamma, beta, mean, var = p
    inv = gamma / jnp.sqrt(var + eps)
    return x * inv[None, :, None, None] + (beta - mean * inv)[None, :, None, None]


def bottleneck_ref(x, params, stride):
    out = jax.nn.relu(_ref_bn(_ref_conv(x, params["conv1_w"], 1, 0), params["bn1"]))
    out = jax.nn.relu(_ref_bn(_ref_conv(out, params["conv2_w"], stride, 1), params["bn2"]))
    out = _ref_bn(_ref_conv(out, params["conv3_w"], 1, 0), params["bn3"])
    if "short_w" in params:
        sc = _ref_bn(_ref_conv(x, params["short_w"], stride, 0), params["short_bn"])
    else:
        sc = x
    return jax.nn.relu(out + sc)


# ----------------------------------- main -----------------------------------

if __name__ == "__main__":
    key = jax.random.PRNGKey(0)
    ks = jax.random.split(key, 20)

    # Small deterministic config: Bottleneck(in_planes=4, planes=4, stride=2)
    in_planes, planes, stride, expansion = 4, 4, 2, 4
    N, H, W = 2, 16, 16

    def bn_params(k, c):
        k1, k2, k3, k4 = jax.random.split(k, 4)
        gamma = 1.0 + 0.1 * jax.random.normal(k1, (c,), jnp.float32)
        beta = 0.1 * jax.random.normal(k2, (c,), jnp.float32)
        mean = 0.1 * jax.random.normal(k3, (c,), jnp.float32)
        var = jax.random.uniform(k4, (c,), jnp.float32, 0.5, 1.5)
        return (gamma, beta, mean, var)

    params = {
        "conv1_w": 0.1 * jax.random.normal(ks[0], (planes, in_planes, 1, 1), jnp.float32),
        "bn1": bn_params(ks[1], planes),
        "conv2_w": 0.1 * jax.random.normal(ks[2], (planes, planes, 3, 3), jnp.float32),
        "bn2": bn_params(ks[3], planes),
        "conv3_w": 0.1 * jax.random.normal(ks[4], (expansion * planes, planes, 1, 1), jnp.float32),
        "bn3": bn_params(ks[5], expansion * planes),
    }
    if stride != 1 or in_planes != expansion * planes:
        params["short_w"] = 0.1 * jax.random.normal(
            ks[6], (expansion * planes, in_planes, 1, 1), jnp.float32)
        params["short_bn"] = bn_params(ks[7], expansion * planes)

    x = jax.random.normal(ks[8], (N, in_planes, H, W), jnp.float32)

    out = jax.block_until_ready(bottleneck_forward(x, params, stride))
    ref = jax.block_until_ready(bottleneck_ref(x, params, stride))

    assert out.shape == (N, expansion * planes, H // stride, W // stride), out.shape
    max_err = float(jnp.max(jnp.abs(out - ref)))
    # bf16 MXU inputs (f32 accumulation) -> loosened tolerance vs f32 reference.
    assert jnp.allclose(out, ref, atol=5e-2, rtol=5e-2), max_err

    print("KERNEL_OK")
</pallas_src>

<mosaic_0001>
module attributes {stable_mosaic.version = 11 : i64} {
  func.func @_matmul_bn_kernel(%arg0: i32, %arg1: i32, %arg2: memref<256x128xbf16, #tpu.memory_space<vmem>>, %arg3: memref<128x128xbf16, #tpu.memory_space<vmem>>, %arg4: memref<1x128xf32, #tpu.memory_space<vmem>>, %arg5: memref<256x128xbf16, #tpu.memory_space<vmem>>) attributes {dimension_semantics = [#tpu.dimension_semantics<parallel>, #tpu.dimension_semantics<parallel>], iteration_bounds = array<i64: 2, 1>, scalar_prefetch = 0 : i64, scratch_operands = 0 : i64, tpu.core_type = #tpu.core_type<tc>, window_params = [{transform_indices = @transform_0, window_bounds = array<i64: 256, 128>}, {transform_indices = @transform_1, window_bounds = array<i64: 128, 128>}, {transform_indices = @transform_2, window_bounds = array<i64: 1, 128>}, {transform_indices = @transform_3, window_bounds = array<i64: 256, 128>}]} {
    %c0 = arith.constant 0 : index
    %c0_0 = arith.constant 0 : index
    %0 = vector.load %arg2[%c0, %c0_0] : memref<256x128xbf16, #tpu.memory_space<vmem>>, vector<256x128xbf16>
    %c0_1 = arith.constant 0 : index
    %c0_2 = arith.constant 0 : index
    %1 = vector.load %arg3[%c0_1, %c0_2] : memref<128x128xbf16, #tpu.memory_space<vmem>>, vector<128x128xbf16>
    %cst = arith.constant dense<0.000000e+00> : vector<256x128xf32>
    %2 = tpu.matmul %0, %1, %cst {dimension_numbers = #tpu.dot_dimension_numbers<[1], [0], [0], [1], [0, 0, 1, 1], [], []>} : vector<256x128xbf16>, vector<128x128xbf16>, vector<256x128xf32> -> vector<256x128xf32>
    %c0_3 = arith.constant 0 : index
    %c0_4 = arith.constant 0 : index
    %3 = vector.load %arg4[%c0_3, %c0_4] : memref<1x128xf32, #tpu.memory_space<vmem>>, vector<1x128xf32>
    %4 = vector.broadcast %3 : vector<1x128xf32> to vector<256x128xf32>
    %5 = arith.addf %2, %4 : vector<256x128xf32>
    %cst_5 = arith.constant 0.000000e+00 : f32
    %6 = vector.broadcast %cst_5 : f32 to vector<256x128xf32>
    %7 = arith.maximumf %5, %6 : vector<256x128xf32>
    %8 = arith.truncf %7 : vector<256x128xf32> to vector<256x128xbf16>
    %c0_6 = arith.constant 0 : index
    %c0_7 = arith.constant 0 : index
    %9 = vector.load %arg5[%c0_6, %c0_7] : memref<256x128xbf16, #tpu.memory_space<vmem>>, vector<256x128xbf16>
    tpu.vector_store %arg5[%c0_6, %c0_7], %8 {strides = array<i32>} : memref<256x128xbf16, #tpu.memory_space<vmem>>, vector<256x128xbf16>,
    return
  }
  func.func @transform_0(%arg0: i32, %arg1: i32) -> (i32, i32) {
    %c0_i32 = arith.constant 0 : i32
    %c0_i32_0 = arith.constant 0 : i32
    return %arg0, %c0_i32 : i32, i32
  }
  func.func @transform_1(%arg0: i32, %arg1: i32) -> (i32, i32) {
    %c0_i32 = arith.constant 0 : i32
    %c0_i32_0 = arith.constant 0 : i32
    return %c0_i32, %arg1 : i32, i32
  }
  func.func @transform_2(%arg0: i32, %arg1: i32) -> (i32, i32) {
    %c0_i32 = arith.constant 0 : i32
    %c0_i32_0 = arith.constant 0 : i32
    return %c0_i32, %arg1 : i32, i32
  }
  func.func @transform_3(%arg0: i32, %arg1: i32) -> (i32, i32) {
    %c0_i32 = arith.constant 0 : i32
    return %arg0, %arg1 : i32, i32
  }
}

</mosaic_0001>

<llo_original>
// kernel: tpu_custom_call.1
$region0: #{tpu_custom_call.1}
  #allocation0 [shape = 'u32[]', space=smem, size = 0x4, offset = 0x4, fixed_abs, tag = 'smem constant byte address 0x4 - core index']
  #allocation1 [shape = 'u32[144,128]{1,0:T(1,128)}', space=vmem, size = 0x12000, scoped, tag = 'internal scratch']
  %s0 = inlined_call_operand.hbm [shape: bf16[512,128], index: 0, kind: input, shape index: {}]
  %s1 = inlined_call_operand.hbm [shape: bf16[128,128], index: 1, kind: input, shape index: {}]
  %s2 = inlined_call_operand.hbm [shape: f32[1,128], index: 2, kind: input, shape index: {}]
  %s3 = inlined_call_operand.hbm [shape: bf16[512,128], index: 3, kind: output, shape index: {}]
  %s4 = sld [smem:[#allocation0]]
  $region57: #{tpu_custom_call.1} parent=0
    _
  %s6 = ssub.s32 1, %s4
  %s7 = scalar_select 0, %s6, %s4
  $region1: #{tpu_custom_call.1} parent=0
    #allocation2 [shape = 'u8[131072]{0}', space=vmem, size = 0x20000, scoped, tag = 'input window, operand 0']
    #allocation3 [shape = 's32[2]{0}', space=sflag, size = 0x8, scoped, tag = 'scoped memory for tpu_custom_call.1']
    #allocation4 [shape = 's32[2]{0}', space=sflag, size = 0x8, scoped, tag = 'scoped memory for tpu_custom_call.1']
    #allocation5 [shape = 'u8[32768]{0}', space=vmem, size = 0x8000, scoped, tag = 'input window, operand 1, single buffered']
    #allocation6 [shape = 's32[1]{0}', space=sflag, size = 0x4, scoped, tag = 'scoped memory for tpu_custom_call.1']
    #allocation7 [shape = 'u8[512]{0}', space=vmem, size = 0x400, scoped, tag = 'input window, operand 2, single buffered']
    #allocation8 [shape = 'u8[131072]{0}', space=vmem, size = 0x20000, scoped, tag = 'output window, operand 0']
    %8 = vsyncpa [#allocation3], 0
    %s9 = scalar_lea.sflag [#allocation3], 1
    %10 = vsyncpa %s9, 0
    %11 = vsyncpa [#allocation6], 0
    %12 = vsyncpa [#allocation4], 0
    %s13 = scalar_lea.sflag [#allocation4], 1
    %14 = vsyncpa %s13, 0
    loop: start=0, step=1, limit=4
    $region2: #{tpu_custom_call.1} parent=1 // loop_pre_header
      _
    $region3: #{tpu_custom_call.1} parent=1 // loop_header
      %s16 = sphi 0, %s20
      %p17 = scmp.ge.s32.totalorder %s16, 4
      %s23 = sphi 0, %s35
      %s24 = sphi 0, %s31
      %s25 = sphi 0, %s23
      %s26 = sphi 0, %s24
      %s27 = sphi 0, %s25
      %s28 = sphi 0, %s26
      %s38 = sphi 0, %s40
      %s41 = sphi 0, %s38
      %s42 = sphi 0, %s41
      %s58 = sphi 0, %s42
      %s64 = sphi 0, %s66
      %s67 = sphi 0, %s64
      %s68 = sphi 0, %s67
      %s84 = sphi 0, %s68
      %s90 = sphi 0, %s92
      %s93 = sphi 0, %s90
      %s94 = sphi 0, %s93
      %s110 = sphi 0, %s94
      %s118 = sphi 0, %s120
      %s121 = sphi 0, %s118
      %s122 = sphi 0, %s121
      %s138 = sphi 0, %s122
    $region4: #{tpu_custom_call.1} parent=1 // loop_header_branch
      %19 = sbr.rel (%p17) target = $region8
    $region5: #{tpu_custom_call.1} parent=1 // loop_body
      %s21 = ssub.s32 %s16, 1
      %s22 = ssub.s32 %s16, 2
      %s29 = sadd.s32 1, %s24
      %p30 = scmp.ge.s32.totalorder %s29, 1
      %s31 = scalar_select %p30, 0, %s29
      %s32 = sadd.s32 1, %s23
      %s33 = scalar_select %p30, %s32, %s23
      %p34 = scmp.ge.s32.totalorder %s33, 2
      %s35 = scalar_select %p34, 0, %s33
      %s36 = ssub.s32 %s23, %s35
      %p37 = scmp.eq.s32.totalorder %s36, 0
      %s39 = sadd.s32 %s38, 1
      %s40 = scalar_select %p37, %s38, %s39
      %p43 = pneg %p37
      %p44 = scmp.eq.s32.totalorder %s16, 1
      %p45 = por %p43, %p44
      %p46 = scmp.ne.s32.totalorder %s38, %s41
      %p47 = scmp.eq.s32.totalorder %s16, 0
      %p48 = por %p46, %p47
      %p49 = scmp.ne.s32.totalorder %s38, %s41
      %p50 = scmp.eq.s32.totalorder %s21, 1
      %p51 = por %p49, %p50
      %p52 = scmp.ne.s32.totalorder %s41, %s42
      %p53 = scmp.eq.s32.totalorder %s21, 0
      %p54 = por %p52, %p53
      %p55 = scmp.ne.s32.totalorder %s41, %s42
      %p56 = scmp.eq.s32.totalorder %s22, 1
      %p57 = por %p55, %p56
      %p59 = scmp.ne.s32.totalorder %s42, %s58
      %p60 = scmp.eq.s32.totalorder %s22, 0
      %p61 = por %p59, %p60
      %s62 = ssub.s32 %s24, %s31
      %p63 = scmp.eq.s32.totalorder %s62, 0
      %s65 = sadd.s32 %s64, 1
      %s66 = scalar_select %p63, %s64, %s65
      %p69 = pneg %p63
      %p70 = scmp.eq.s32.totalorder %s16, 1
      %p71 = por %p69, %p70
      %p72 = scmp.ne.s32.totalorder %s64, %s67
      %p73 = scmp.eq.s32.totalorder %s16, 0
      %p74 = por %p72, %p73
      %p75 = scmp.ne.s32.totalorder %s64, %s67
      %p76 = scmp.eq.s32.totalorder %s21, 1
      %p77 = por %p75, %p76
      %p78 = scmp.ne.s32.totalorder %s67, %s68
      %p79 = scmp.eq.s32.totalorder %s21, 0
      %p80 = por %p78, %p79
      %p81 = scmp.ne.s32.totalorder %s67, %s68
      %p82 = scmp.eq.s32.totalorder %s22, 1
      %p83 = por %p81, %p82
      %p85 = scmp.ne.s32.totalorder %s68, %s84
      %p86 = scmp.eq.s32.totalorder %s22, 0
      %p87 = por %p85, %p86
      %s88 = ssub.s32 %s24, %s31
      %p89 = scmp.eq.s32.totalorder %s88, 0
      %s91 = sadd.s32 %s90, 1
      %s92 = scalar_select %p89, %s90, %s91
      %p95 = pneg %p89
      %p96 = scmp.eq.s32.totalorder %s16, 1
      %p97 = por %p95, %p96
      %p98 = scmp.ne.s32.totalorder %s90, %s93
      %p99 = scmp.eq.s32.totalorder %s16, 0
      %p100 = por %p98, %p99
      %p101 = scmp.ne.s32.totalorder %s90, %s93
      %p102 = scmp.eq.s32.totalorder %s21, 1
      %p103 = por %p101, %p102
      %p104 = scmp.ne.s32.totalorder %s93, %s94
      %p105 = scmp.eq.s32.totalorder %s21, 0
      %p106 = por %p104, %p105
      %p107 = scmp.ne.s32.totalorder %s93, %s94
      %p108 = scmp.eq.s32.totalorder %s22, 1
      %p109 = por %p107, %p108
      %p111 = scmp.ne.s32.totalorder %s94, %s110
      %p112 = scmp.eq.s32.totalorder %s22, 0
      %p113 = por %p111, %p112
      %s114 = ssub.s32 %s23, %s35
      %s115 = ssub.s32 %s24, %s31
      %s116 = sor.u32 %s114, %s115
      %p117 = scmp.eq.s32.totalorder %s116, 0
      %s119 = sadd.s32 %s118, 1
      %s120 = scalar_select %p117, %s118, %s119
      %p123 = pneg %p117
      %p124 = scmp.eq.s32.totalorder %s16, 1
      %p125 = por %p123, %p124
      %p126 = scmp.ne.s32.totalorder %s118, %s121
      %p127 = scmp.eq.s32.totalorder %s16, 0
      %p128 = por %p126, %p127
      %p129 = scmp.ne.s32.totalorder %s118, %s121
      %p130 = scmp.eq.s32.totalorder %s21, 1
      %p131 = por %p129, %p130
      %p132 = scmp.ne.s32.totalorder %s121, %s122
      %p133 = scmp.eq.s32.totalorder %s21, 0
      %p134 = por %p132, %p133
      %p135 = scmp.ne.s32.totalorder %s121, %s122
      %p136 = scmp.eq.s32.totalorder %s22, 1
      %p137 = por %p135, %p136
      %p139 = scmp.ne.s32.totalorder %s122, %s138
      %p140 = scmp.eq.s32.totalorder %s22, 0
      %p141 = por %p139, %p140
      %p142 = scmp.le.s32.totalorder 1, %s16
      %p143 = scmp.lt.s32.totalorder %s16, 3
      %p144 = pnand %p142, %p143
      %p145 = pneg %p144
      // Predicated region
      $region9: #{tpu_custom_call.1} parent=5 // pred_check
        _
      $region10: #{tpu_custom_call.1} parent=5 // pred_check_branch
        %147 = sbr.rel (%p144) target = $region12
      $region11: #{tpu_custom_call.1} parent=5 // pred_region
        %s148 = ssub.s32 %s16, 1
        // Predicated region
        $region13: #{tpu_custom_call.1} parent=11 // pred_check
          %p149 = pneg %p80
        $region14: #{tpu_custom_call.1} parent=11 // pred_check_branch
          %151 = sbr.rel (%p149) target = $region16
        $region15: #{tpu_custom_call.1} parent=11 // pred_region
          %s153 = ssub.s32 1024, 1024
          %154 = vsyncadd [#allocation6], %s153
          %s155 = smul.addr %s26, 64
          %s156 = scalar_lea.hbm %s1, %s155
          %s157 = sshll.u32 [#allocation5], 4
          %s158 = int_to_ptr.vmem [resolvable:$true] %s157
          %163 = dma.hbm_to_vmem [thread:$0]  %s156, 1024, %s158, [#allocation6], 64, 64, 4
        $region16: #{tpu_custom_call.1} parent=11 // pred_fallthru
          _
        // Predicated region
        $region17: #{tpu_custom_call.1} parent=11 // pred_check
          %p164 = pneg %p106
        $region18: #{tpu_custom_call.1} parent=11 // pred_check_branch
          %166 = sbr.rel (%p164) target = $region20
        $region19: #{tpu_custom_call.1} parent=11 // pred_region
          %s168 = ssub.s32 16, 16
          %169 = vsyncadd [#allocation6], %s168
          %s170 = smul.addr %s26, 16
          %s171 = scalar_lea.hbm %s2, %s170
          %s173 = sshll.u32 [#allocation7], 4
          %s174 = int_to_ptr.vmem [resolvable:$true] %s173
          %176 = dma.hbm_to_vmem [thread:$0]  %s171, 16, %s174, [#allocation6]
        $region20: #{tpu_custom_call.1} parent=11 // pred_fallthru
          _
      $region12: #{tpu_custom_call.1} parent=5 // pred_fallthru
        _
      %p177 = scmp.lt.s32.totalorder %s16, 2
      // Predicated region
      $region21: #{tpu_custom_call.1} parent=5 // pred_check
        %p178 = pneg %p177
      $region22: #{tpu_custom_call.1} parent=5 // pred_check_branch
        %180 = sbr.rel (%p178) target = $region24
      $region23: #{tpu_custom_call.1} parent=5 // pred_region
        // Predicated region
        $region25: #{tpu_custom_call.1} parent=23 // pred_check
          %p181 = pneg %p48
        $region26: #{tpu_custom_call.1} parent=23 // pred_check_branch
          %183 = sbr.rel (%p181) target = $region28
        $region27: #{tpu_custom_call.1} parent=23 // pred_region
          %s184 = sand.u32 %s38, 1
          %s185 = scalar_lea.sflag [#allocation3], %s184
          %s186 = sand.u32 %s38, 1
          %s187 = smul.addr %s186, 128
          %s188 = scalar_lea.vmem [#allocation2], %s187
          %s189 = smul.u32 32, %s23
          %s191 = ssub.s32 2048, 2048
          %192 = vsyncadd %s185, %s191
          %s193 = smul.addr %s189, 64
          %s194 = scalar_lea.hbm %s0, %s193
          %s195 = sshll.u32 %s188, 4
          %s196 = int_to_ptr.vmem [resolvable:$true] %s195
          %201 = dma.hbm_to_vmem [thread:$0]  %s194, 2048, %s196, %s185, 64, 64, 4
        $region28: #{tpu_custom_call.1} parent=23 // pred_fallthru
          _
      $region24: #{tpu_custom_call.1} parent=5 // pred_fallthru
        _
      %p202 = scmp.le.s32.totalorder 1, %s16
      %p203 = scmp.lt.s32.totalorder %s16, 3
      %p204 = pnand %p202, %p203
      %p205 = pneg %p204
      // Predicated region
      $region29: #{tpu_custom_call.1} parent=5 // pred_check
        _
      $region30: #{tpu_custom_call.1} parent=5 // pred_check_branch
        %207 = sbr.rel (%p204) target = $region32
      $region31: #{tpu_custom_call.1} parent=5 // pred_region
        %s208 = ssub.s32 %s16, 1
        %s209 = sand.u32 %s41, 1
        %s210 = scalar_lea.sflag [#allocation3], %s209
        %s211 = sand.u32 %s41, 1
        %s212 = smul.addr %s211, 128
        %s213 = scalar_lea.vmem [#allocation2], %s212
        // Predicated region
        $region33: #{tpu_custom_call.1} parent=31 // pred_check
          %p214 = pneg %p54
        $region34: #{tpu_custom_call.1} parent=31 // pred_check_branch
          %216 = sbr.rel (%p214) target = $region36
        $region35: #{tpu_custom_call.1} parent=31 // pred_region
          %217 = dma.done %s210, 2048
        $region36: #{tpu_custom_call.1} parent=31 // pred_fallthru
          _
        // Predicated region
        $region37: #{tpu_custom_call.1} parent=31 // pred_check
          %p218 = pneg %p80
        $region38: #{tpu_custom_call.1} parent=31 // pred_check_branch
          %220 = sbr.rel (%p218) target = $region40
        $region39: #{tpu_custom_call.1} parent=31 // pred_region
          %221 = dma.done [#allocation6], 1024
        $region40: #{tpu_custom_call.1} parent=31 // pred_fallthru
          _
        // Predicated region
        $region41: #{tpu_custom_call.1} parent=31 // pred_check
          %p222 = pneg %p106
        $region42: #{tpu_custom_call.1} parent=31 // pred_check_branch
          %224 = sbr.rel (%p222) target = $region44
        $region43: #{tpu_custom_call.1} parent=31 // pred_region
          %225 = dma.done [#allocation6], 16
        $region44: #{tpu_custom_call.1} parent=31 // pred_fallthru
          _
        %s226 = sand.u32 %s41, 1
        %s227 = scalar_lea.sflag [#allocation3], %s226
        %s228 = sand.u32 %s41, 1
        %s229 = smul.addr %s228, 128
        %s230 = scalar_lea.vmem [#allocation2], %s229
        %p231 = pneg %p54
        %p232 = pneg %p51
        %p233 = pneg %p80
        %p234 = pneg %p77
        %p235 = pneg %p106
        %p236 = pneg %p103
        %p237 = pneg %p134
        %p238 = pneg %p131
        %s239 = sand.u32 %s121, 1
        %s240 = scalar_lea.sflag [#allocation4], %s239
        %s241 = sand.u32 %s121, 1
        %s242 = smul.addr %s241, 128
        %s243 = scalar_lea.vmem [#allocation8], %s242
        %s244 = smul.u32 32, %s25
        %s245 = smul.u32 32, %s25
        %v247 = vld [vmem:[%s213] sm:$0xf]
        %v248 = vld [vmem:[%s213 + $0x4] sm:$0xf]
        %v249 = vld [vmem:[%s213 + $0x8] sm:$0xf]
        %v250 = vld [vmem:[%s213 + $0xc] sm:$0xf]
        %v251 = vld [vmem:[%s213 + $0x10] sm:$0xf]
        %v252 = vld [vmem:[%s213 + $0x14] sm:$0xf]
        %v253 = vld [vmem:[%s213 + $0x18] sm:$0xf]
        %v254 = vld [vmem:[%s213 + $0x1c] sm:$0xf]
        %v255 = vld [vmem:[%s213 + $0x20] sm:$0xf]
        %v256 = vld [vmem:[%s213 + $0x24] sm:$0xf]
        %v257 = vld [vmem:[%s213 + $0x28] sm:$0xf]
        %v258 = vld [vmem:[%s213 + $0x2c] sm:$0xf]
        %v259 = vld [vmem:[%s213 + $0x30] sm:$0xf]
        %v260 = vld [vmem:[%s213 + $0x34] sm:$0xf]
        %v261 = vld [vmem:[%s213 + $0x38] sm:$0xf]
        %v262 = vld [vmem:[%s213 + $0x3c] sm:$0xf]
        %v263 = vld [vmem:[%s213 + $0x40] sm:$0xf]
        %v264 = vld [vmem:[%s213 + $0x44] sm:$0xf]
        %v265 = vld [vmem:[%s213 + $0x48] sm:$0xf]
        %v266 = vld [vmem:[%s213 + $0x4c] sm:$0xf]
        %v267 = vld [vmem:[%s213 + $0x50] sm:$0xf]
        %v268 = vld [vmem:[%s213 + $0x54] sm:$0xf]
        %v269 = vld [vmem:[%s213 + $0x58] sm:$0xf]
        %v270 = vld [vmem:[%s213 + $0x5c] sm:$0xf]
        %v271 = vld [vmem:[%s213 + $0x60] sm:$0xf]
        %v272 = vld [vmem:[%s213 + $0x64] sm:$0xf]
        %v273 = vld [vmem:[%s213 + $0x68] sm:$0xf]
        %v274 = vld [vmem:[%s213 + $0x6c] sm:$0xf]
        %v275 = vld [vmem:[%s213 + $0x70] sm:$0xf]
        %v276 = vld [vmem:[%s213 + $0x74] sm:$0xf]
        %v277 = vld [vmem:[%s213 + $0x78] sm:$0xf]
        %v278 = vld [vmem:[%s213 + $0x7c] sm:$0xf]
        %v279 = vld [vmem:[#allocation5] sm:$0xf]
        %v280 = vld [vmem:[#allocation5 + $0x4] sm:$0xf]
        %v281 = vld [vmem:[#allocation5 + $0x8] sm:$0xf]
        %v282 = vld [vmem:[#allocation5 + $0xc] sm:$0xf]
        %v283 = vld [vmem:[#allocation5 + $0x10] sm:$0xf]
        %v284 = vld [vmem:[#allocation5 + $0x14] sm:$0xf]
        %v285 = vld [vmem:[#allocation5 + $0x18] sm:$0xf]
        %v286 = vld [vmem:[#allocation5 + $0x1c] sm:$0xf]
        %v287 = vld [vmem:[#allocation5 + $0x20] sm:$0xf]
        %v288 = vld [vmem:[#allocation5 + $0x24] sm:$0xf]
        %v289 = vld [vmem:[#allocation5 + $0x28] sm:$0xf]
        %v290 = vld [vmem:[#allocation5 + $0x2c] sm:$0xf]
        %v291 = vld [vmem:[#allocation5 + $0x30] sm:$0xf]
        %v292 = vld [vmem:[#allocation5 + $0x34] sm:$0xf]
        %v293 = vld [vmem:[#allocation5 + $0x38] sm:$0xf]
        %v294 = vld [vmem:[#allocation5 + $0x3c] sm:$0xf]
        %v295 = vld [vmem:[#allocation7] sm:$0x1]
        %v297 = vlaneseq
        %v298 = vshrl.u32 %v297, 7
        %v299 = vsub.s32 0, %v298
        %v300 = vrot.slane %v295, %v299
        %v334 = vunpack.c.l.b16 %v247
        %v335 = vunpack.c.l.b16 %v248
        %v336 = vunpack.c.l.b16 %v249
        %v337 = vunpack.c.l.b16 %v250
        %v338 = vunpack.c.l.b16 %v251
        %v339 = vunpack.c.l.b16 %v252
        %v340 = vunpack.c.l.b16 %v253
        %v341 = vunpack.c.l.b16 %v254
        %v342 = vunpack.c.l.b16 %v255
        %v343 = vunpack.c.l.b16 %v256
        %v344 = vunpack.c.l.b16 %v257
        %v345 = vunpack.c.l.b16 %v258
        %v346 = vunpack.c.l.b16 %v259
        %v347 = vunpack.c.l.b16 %v260
        %v348 = vunpack.c.l.b16 %v261
        %v349 = vunpack.c.l.b16 %v262
        %v350 = vunpack.c.l.b16 %v263
        %v351 = vunpack.c.l.b16 %v264
        %v352 = vunpack.c.l.b16 %v265
        %v353 = vunpack.c.l.b16 %v266
        %v354 = vunpack.c.l.b16 %v267
        %v355 = vunpack.c.l.b16 %v268
        %v356 = vunpack.c.l.b16 %v269
        %v357 = vunpack.c.l.b16 %v270
        %v358 = vunpack.c.l.b16 %v271
        %v359 = vunpack.c.l.b16 %v272
        %v360 = vunpack.c.l.b16 %v273
        %v361 = vunpack.c.l.b16 %v274
        %v362 = vunpack.c.l.b16 %v275
        %v363 = vunpack.c.l.b16 %v276
        %v364 = vunpack.c.l.b16 %v277
        %v365 = vunpack.c.l.b16 %v278
        %v366 = vpack.c.b16 %v335, %v334
        %v367 = vpack.c.b16 %v337, %v336
        %v368 = vpack.c.b16 %v339, %v338
        %v369 = vpack.c.b16 %v341, %v340
        %v370 = vpack.c.b16 %v343, %v342
        %v371 = vpack.c.b16 %v345, %v344
        %v372 = vpack.c.b16 %v347, %v346
        %v373 = vpack.c.b16 %v349, %v348
        %v374 = vpack.c.b16 %v351, %v350
        %v375 = vpack.c.b16 %v353, %v352
        %v376 = vpack.c.b16 %v355, %v354
        %v377 = vpack.c.b16 %v357, %v356
        %v378 = vpack.c.b16 %v359, %v358
        %v379 = vpack.c.b16 %v361, %v360
        %v380 = vpack.c.b16 %v363, %v362
        %v381 = vpack.c.b16 %v365, %v364
        %v414 = vunpack.c.l.b16 %v279
        %v415 = vunpack.c.l.b16 %v280
        %v416 = vunpack.c.l.b16 %v281
        %v417 = vunpack.c.l.b16 %v282
        %v418 = vunpack.c.l.b16 %v283
        %v419 = vunpack.c.l.b16 %v284
        %v420 = vunpack.c.l.b16 %v285
        %v421 = vunpack.c.l.b16 %v286
        %v422 = vunpack.c.l.b16 %v287
        %v423 = vunpack.c.l.b16 %v288
        %v424 = vunpack.c.l.b16 %v289
        %v425 = vunpack.c.l.b16 %v290
        %v426 = vunpack.c.l.b16 %v291
        %v427 = vunpack.c.l.b16 %v292
        %v428 = vunpack.c.l.b16 %v293
        %v429 = vunpack.c.l.b16 %v294
        %v430 = vpack.c.b16 %v415, %v414
        %v431 = vpack.c.b16 %v417, %v416
        %v432 = vpack.c.b16 %v419, %v418
        %v433 = vpack.c.b16 %v421, %v420
        %v434 = vpack.c.b16 %v423, %v422
        %v435 = vpack.c.b16 %v425, %v424
        %v436 = vpack.c.b16 %v427, %v426
        %v437 = vpack.c.b16 %v429, %v428
        %446 = vmatprep.subr.bf16.mxu0 0
        %447 = vmatpush1.bf16.msra.mxu0 %v430
        %448 = vmatprep.subr.bf16.mxu0 0
        %449 = vmatpush1.bf16.msra.mxu0 %v431
        %450 = vmatprep.subr.bf16.mxu0 0
        %451 = vmatpush1.bf16.msra.mxu0 %v432
        %452 = vmatprep.subr.bf16.mxu0 0
        %453 = vmatpush1.bf16.msra.mxu0 %v433
        %454 = vmatprep.subr.bf16.mxu0 0
        %455 = vmatpush1.bf16.msra.mxu0 %v434
        %456 = vmatprep.subr.bf16.mxu0 0
        %457 = vmatpush1.bf16.msra.mxu0 %v435
        %458 = vmatprep.subr.bf16.mxu0 0
        %459 = vmatpush1.bf16.msra.mxu0 %v436
        %460 = vmatprep.subr.bf16.mxu0 0
        %461 = vmatpush1.bf16.msra.mxu0 %v437
        %462 = vmatprep.subr.bf16.mxu0 0
        %463 = vmatpush1.bf16.msra.mxu0 0
        %464 = vmatprep.subr.bf16.mxu0 0
        %465 = vmatpush1.bf16.msra.mxu0 0
        %466 = vmatprep.subr.bf16.mxu0 0
        %467 = vmatpush1.bf16.msra.mxu0 0
        %468 = vmatprep.subr.bf16.mxu0 0
        %469 = vmatpush1.bf16.msra.mxu0 0
        %470 = vmatprep.subr.bf16.mxu0 0
        %471 = vmatpush1.bf16.msra.mxu0 0
        %472 = vmatprep.subr.bf16.mxu0 0
        %473 = vmatpush1.bf16.msra.mxu0 0
        %474 = vmatprep.subr.bf16.mxu0 0
        %475 = vmatpush1.bf16.msra.mxu0 0
        %476 = vmatprep.subr.bf16.mxu0 0
        %477 = vmatpush1.bf16.msra.mxu0 0
        %478 = vmatprep.mubr.bf16.mxu0 0
        %479 = vmatmul.mubr.bf16.gmra.mrb[0].mxu0 %v366
        %v480 = vpop.f32.mrb[0].mxu0
        %v481 = vadd.f32 %v300, %v480
        %v482 = vpop.f32.mrb[0].mxu0
        %v483 = vpop.f32.mrb[0].mxu0
        %v484 = vadd.f32 %v300, %v483
        %v485 = vpop.f32.mrb[0].mxu0
        %486 = vmatprep.mubr.bf16.mxu0 0
        %487 = vmatmul.mubr.bf16.gmra.mrb[0].mxu0 %v367
        %v488 = vpop.f32.mrb[0].mxu0
        %v489 = vadd.f32 %v300, %v488
        %v490 = vpop.f32.mrb[0].mxu0
        %v491 = vpop.f32.mrb[0].mxu0
        %v492 = vadd.f32 %v300, %v491
        %v493 = vpop.f32.mrb[0].mxu0
        %494 = vmatprep.mubr.bf16.mxu0 0
        %495 = vmatmul.mubr.bf16.gmra.mrb[0].mxu0 %v368
        %v496 = vpop.f32.mrb[0].mxu0
        %v497 = vadd.f32 %v300, %v496
        %v498 = vpop.f32.mrb[0].mxu0
        %v499 = vpop.f32.mrb[0].mxu0
        %v500 = vadd.f32 %v300, %v499
        %v501 = vpop.f32.mrb[0].mxu0
        %502 = vmatprep.mubr.bf16.mxu0 0
        %503 = vmatmul.mubr.bf16.gmra.mrb[0].mxu0 %v369
        %v504 = vpop.f32.mrb[0].mxu0
        %v505 = vadd.f32 %v300, %v504
        %v506 = vpop.f32.mrb[0].mxu0
        %v507 = vpop.f32.mrb[0].mxu0
        %v508 = vadd.f32 %v300, %v507
        %v509 = vpop.f32.mrb[0].mxu0
        %510 = vmatprep.mubr.bf16.mxu0 0
        %511 = vmatmul.mubr.bf16.gmra.mrb[0].mxu0 %v370
        %v512 = vpop.f32.mrb[0].mxu0
        %v513 = vadd.f32 %v300, %v512
        %v514 = vpop.f32.mrb[0].mxu0
        %v515 = vpop.f32.mrb[0].mxu0
        %v516 = vadd.f32 %v300, %v515
        %v517 = vpop.f32.mrb[0].mxu0
        %518 = vmatprep.mubr.bf16.mxu0 0
        %519 = vmatmul.mubr.bf16.gmra.mrb[0].mxu0 %v371
        %v520 = vpop.f32.mrb[0].mxu0
        %v521 = vadd.f32 %v300, %v520
        %v522 = vpop.f32.mrb[0].mxu0
        %v523 = vpop.f32.mrb[0].mxu0
        %v524 = vadd.f32 %v300, %v523
        %v525 = vpop.f32.mrb[0].mxu0
        %526 = vmatprep.mubr.bf16.mxu0 0
        %527 = vmatmul.mubr.bf16.gmra.mrb[0].mxu0 %v372
        %v528 = vpop.f32.mrb[0].mxu0
        %v529 = vadd.f32 %v300, %v528
        %v530 = vpop.f32.mrb[0].mxu0
        %v531 = vpop.f32.mrb[0].mxu0
        %v532 = vadd.f32 %v300, %v531
        %v533 = vpop.f32.mrb[0].mxu0
        %534 = vmatprep.mubr.bf16.mxu0 0
        %535 = vmatmul.mubr.bf16.gmra.mrb[0].mxu0 %v373
        %v536 = vpop.f32.mrb[0].mxu0
        %v537 = vadd.f32 %v300, %v536
        %v538 = vpop.f32.mrb[0].mxu0
        %v539 = vpop.f32.mrb[0].mxu0
        %v540 = vadd.f32 %v300, %v539
        %v541 = vpop.f32.mrb[0].mxu0
        %542 = vmatprep.mubr.bf16.mxu0 0
        %543 = vmatmul.mubr.bf16.gmra.mrb[0].mxu0 %v374
        %v544 = vpop.f32.mrb[0].mxu0
        %v545 = vadd.f32 %v300, %v544
        %v546 = vpop.f32.mrb[0].mxu0
        %v547 = vpop.f32.mrb[0].mxu0
        %v548 = vadd.f32 %v300, %v547
        %v549 = vpop.f32.mrb[0].mxu0
        %550 = vmatprep.mubr.bf16.mxu0 0
        %551 = vmatmul.mubr.bf16.gmra.mrb[0].mxu0 %v375
        %v552 = vpop.f32.mrb[0].mxu0
        %v553 = vadd.f32 %v300, %v552
        %v554 = vpop.f32.mrb[0].mxu0
        %v555 = vpop.f32.mrb[0].mxu0
        %v556 = vadd.f32 %v300, %v555
        %v557 = vpop.f32.mrb[0].mxu0
        %558 = vmatprep.mubr.bf16.mxu0 0
        %559 = vmatmul.mubr.bf16.gmra.mrb[0].mxu0 %v376
        %v560 = vpop.f32.mrb[0].mxu0
        %v561 = vadd.f32 %v300, %v560
        %v562 = vpop.f32.mrb[0].mxu0
        %v563 = vpop.f32.mrb[0].mxu0
        %v564 = vadd.f32 %v300, %v563
        %v565 = vpop.f32.mrb[0].mxu0
        %566 = vmatprep.mubr.bf16.mxu0 0
        %567 = vmatmul.mubr.bf16.gmra.mrb[0].mxu0 %v377
        %v568 = vpop.f32.mrb[0].mxu0
        %v569 = vadd.f32 %v300, %v568
        %v570 = vpop.f32.mrb[0].mxu0
        %v571 = vpop.f32.mrb[0].mxu0
        %v572 = vadd.f32 %v300, %v571
        %v573 = vpop.f32.mrb[0].mxu0
        %574 = vmatprep.mubr.bf16.mxu0 0
        %575 = vmatmul.mubr.bf16.gmra.mrb[0].mxu0 %v378
        %v576 = vpop.f32.mrb[0].mxu0
        %v577 = vadd.f32 %v300, %v576
        %v578 = vpop.f32.mrb[0].mxu0
        %v579 = vpop.f32.mrb[0].mxu0
        %v580 = vadd.f32 %v300, %v579
        %v581 = vpop.f32.mrb[0].mxu0
        %582 = vmatprep.mubr.bf16.mxu0 0
        %583 = vmatmul.mubr.bf16.gmra.mrb[0].mxu0 %v379
        %v584 = vpop.f32.mrb[0].mxu0
        %v585 = vadd.f32 %v300, %v584
        %v586 = vpop.f32.mrb[0].mxu0
        %v587 = vpop.f32.mrb[0].mxu0
        %v588 = vadd.f32 %v300, %v587
        %v589 = vpop.f32.mrb[0].mxu0
        %590 = vmatprep.mubr.bf16.mxu0 0
        %591 = vmatmul.mubr.bf16.gmra.mrb[0].mxu0 %v380
        %v592 = vpop.f32.mrb[0].mxu0
        %v593 = vadd.f32 %v300, %v592
        %v594 = vpop.f32.mrb[0].mxu0
        %v595 = vpop.f32.mrb[0].mxu0
        %v596 = vadd.f32 %v300, %v595
        %v597 = vpop.f32.mrb[0].mxu0
        %598 = vmatprep.mubr.bf16.mxu0 0
        %599 = vmatmul.mubr.bf16.gmra.mrb[0].mxu0 %v381
        %v600 = vpop.f32.mrb[0].mxu0
        %v601 = vadd.f32 %v300, %v600
        %v602 = vpop.f32.mrb[0].mxu0
        %v603 = vpop.f32.mrb[0].mxu0
        %v604 = vadd.f32 %v300, %v603
        %v605 = vpop.f32.mrb[0].mxu0
        %606 = vdwg.mxu0
        %v607 = vmax.f32 %v481, 0.0
        %v608 = vmax.f32 %v484, 0.0
        %v609 = vmax.f32 %v489, 0.0
        %v610 = vmax.f32 %v492, 0.0
        %v611 = vmax.f32 %v497, 0.0
        %v612 = vmax.f32 %v500, 0.0
        %v613 = vmax.f32 %v505, 0.0
        %v614 = vmax.f32 %v508, 0.0
        %v615 = vmax.f32 %v513, 0.0
        %v616 = vmax.f32 %v516, 0.0
        %v617 = vmax.f32 %v521, 0.0
        %v618 = vmax.f32 %v524, 0.0
        %v619 = vmax.f32 %v529, 0.0
        %v620 = vmax.f32 %v532, 0.0
        %v621 = vmax.f32 %v537, 0.0
        %v622 = vmax.f32 %v540, 0.0
        %v623 = vmax.f32 %v545, 0.0
        %v624 = vmax.f32 %v548, 0.0
        %v625 = vmax.f32 %v553, 0.0
        %v626 = vmax.f32 %v556, 0.0
        %v627 = vmax.f32 %v561, 0.0
        %v628 = vmax.f32 %v564, 0.0
        %v629 = vmax.f32 %v569, 0.0
        %v630 = vmax.f32 %v572, 0.0
        %v631 = vmax.f32 %v577, 0.0
        %v632 = vmax.f32 %v580, 0.0
        %v633 = vmax.f32 %v585, 0.0
        %v634 = vmax.f32 %v588, 0.0
        %v635 = vmax.f32 %v593, 0.0
        %v636 = vmax.f32 %v596, 0.0
        %v637 = vmax.f32 %v601, 0.0
        %v638 = vmax.f32 %v604, 0.0
        %v639 = vpack.c.bf16 %v608, %v607
        %v640 = vpack.c.bf16 %v610, %v609
        %v641 = vpack.c.bf16 %v612, %v611
        %v642 = vpack.c.bf16 %v614, %v613
        %v643 = vpack.c.bf16 %v616, %v615
        %v644 = vpack.c.bf16 %v618, %v617
        %v645 = vpack.c.bf16 %v620, %v619
        %v646 = vpack.c.bf16 %v622, %v621
        %v647 = vpack.c.bf16 %v624, %v623
        %v648 = vpack.c.bf16 %v626, %v625
        %v649 = vpack.c.bf16 %v628, %v627
        %v650 = vpack.c.bf16 %v630, %v629
        %v651 = vpack.c.bf16 %v632, %v631
        %v652 = vpack.c.bf16 %v634, %v633
        %v653 = vpack.c.bf16 %v636, %v635
        %v654 = vpack.c.bf16 %v638, %v637
        %v671 = vunpack.c.l.b16 %v639
        %v672 = vunpack.c.h.b16 %v639
        %v673 = vunpack.c.l.b16 %v640
        %v674 = vunpack.c.h.b16 %v640
        %v675 = vunpack.c.l.b16 %v641
        %v676 = vunpack.c.h.b16 %v641
        %v677 = vunpack.c.l.b16 %v642
        %v678 = vunpack.c.h.b16 %v642
        %v679 = vunpack.c.l.b16 %v643
        %v680 = vunpack.c.h.b16 %v643
        %v681 = vunpack.c.l.b16 %v644
        %v682 = vunpack.c.h.b16 %v644
        %v683 = vunpack.c.l.b16 %v645
        %v684 = vunpack.c.h.b16 %v645
        %v685 = vunpack.c.l.b16 %v646
        %v686 = vunpack.c.h.b16 %v646
        %v687 = vunpack.c.l.b16 %v647
        %v688 = vunpack.c.h.b16 %v647
        %v689 = vunpack.c.l.b16 %v648
        %v690 = vunpack.c.h.b16 %v648
        %v691 = vunpack.c.l.b16 %v649
        %v692 = vunpack.c.h.b16 %v649
        %v693 = vunpack.c.l.b16 %v650
        %v694 = vunpack.c.h.b16 %v650
        %v695 = vunpack.c.l.b16 %v651
        %v696 = vunpack.c.h.b16 %v651
        %v697 = vunpack.c.l.b16 %v652
        %v698 = vunpack.c.h.b16 %v652
        %v699 = vunpack.c.l.b16 %v653
        %v700 = vunpack.c.h.b16 %v653
        %v701 = vunpack.c.l.b16 %v654
        %v702 = vunpack.c.h.b16 %v654
        %v703 = vpack.c.b16 %v671, %v671
        %v704 = vpack.c.b16 %v672, %v672
        %v705 = vpack.c.b16 %v673, %v673
        %v706 = vpack.c.b16 %v674, %v674
        %v707 = vpack.c.b16 %v675, %v675
        %v708 = vpack.c.b16 %v676, %v676
        %v709 = vpack.c.b16 %v677, %v677
        %v710 = vpack.c.b16 %v678, %v678
        %v711 = vpack.c.b16 %v679, %v679
        %v712 = vpack.c.b16 %v680, %v680
        %v713 = vpack.c.b16 %v681, %v681
        %v714 = vpack.c.b16 %v682, %v682
        %v715 = vpack.c.b16 %v683, %v683
        %v716 = vpack.c.b16 %v684, %v684
        %v717 = vpack.c.b16 %v685, %v685
        %v718 = vpack.c.b16 %v686, %v686
        %v719 = vpack.c.b16 %v687, %v687
        %v720 = vpack.c.b16 %v688, %v688
        %v721 = vpack.c.b16 %v689, %v689
        %v722 = vpack.c.b16 %v690, %v690
        %v723 = vpack.c.b16 %v691, %v691
        %v724 = vpack.c.b16 %v692, %v692
        %v725 = vpack.c.b16 %v693, %v693
        %v726 = vpack.c.b16 %v694, %v694
        %v727 = vpack.c.b16 %v695, %v695
        %v728 = vpack.c.b16 %v696, %v696
        %v729 = vpack.c.b16 %v697, %v697
        %v730 = vpack.c.b16 %v698, %v698
        %v731 = vpack.c.b16 %v699, %v699
        %v732 = vpack.c.b16 %v700, %v700
        %v733 = vpack.c.b16 %v701, %v701
        %v734 = vpack.c.b16 %v702, %v702
        %767 = vst [vmem:[%s243] sm:$0xf] %v703
        %768 = vst [vmem:[%s243 + $0x4] sm:$0xf] %v704
        %769 = vst [vmem:[%s243 + $0x8] sm:$0xf] %v705
        %770 = vst [vmem:[%s243 + $0xc] sm:$0xf] %v706
        %771 = vst [vmem:[%s243 + $0x10] sm:$0xf] %v707
        %772 = vst [vmem:[%s243 + $0x14] sm:$0xf] %v708
        %773 = vst [vmem:[%s243 + $0x18] sm:$0xf] %v709
        %774 = vst [vmem:[%s243 + $0x1c] sm:$0xf] %v710
        %775 = vst [vmem:[%s243 + $0x20] sm:$0xf] %v711
        %776 = vst [vmem:[%s243 + $0x24] sm:$0xf] %v712
        %777 = vst [vmem:[%s243 + $0x28] sm:$0xf] %v713
        %778 = vst [vmem:[%s243 + $0x2c] sm:$0xf] %v714
        %779 = vst [vmem:[%s243 + $0x30] sm:$0xf] %v715
        %780 = vst [vmem:[%s243 + $0x34] sm:$0xf] %v716
        %781 = vst [vmem:[%s243 + $0x38] sm:$0xf] %v717
        %782 = vst [vmem:[%s243 + $0x3c] sm:$0xf] %v718
        %783 = vst [vmem:[%s243 + $0x40] sm:$0xf] %v719
        %784 = vst [vmem:[%s243 + $0x44] sm:$0xf] %v720
        %785 = vst [vmem:[%s243 + $0x48] sm:$0xf] %v721
        %786 = vst [vmem:[%s243 + $0x4c] sm:$0xf] %v722
        %787 = vst [vmem:[%s243 + $0x50] sm:$0xf] %v723
        %788 = vst [vmem:[%s243 + $0x54] sm:$0xf] %v724
        %789 = vst [vmem:[%s243 + $0x58] sm:$0xf] %v725
        %790 = vst [vmem:[%s243 + $0x5c] sm:$0xf] %v726
        %791 = vst [vmem:[%s243 + $0x60] sm:$0xf] %v727
        %792 = vst [vmem:[%s243 + $0x64] sm:$0xf] %v728
        %793 = vst [vmem:[%s243 + $0x68] sm:$0xf] %v729
        %794 = vst [vmem:[%s243 + $0x6c] sm:$0xf] %v730
        %795 = vst [vmem:[%s243 + $0x70] sm:$0xf] %v731
        %796 = vst [vmem:[%s243 + $0x74] sm:$0xf] %v732
        %797 = vst [vmem:[%s243 + $0x78] sm:$0xf] %v733
        %798 = vst [vmem:[%s243 + $0x7c] sm:$0xf] %v734
        %s799 = sand.u32 %s121, 1
        %s800 = scalar_lea.sflag [#allocation4], %s799
        %s801 = sand.u32 %s121, 1
        %s802 = smul.addr %s801, 128
        %s803 = scalar_lea.vmem [#allocation8], %s802
        // Predicated region
        $region45: #{tpu_custom_call.1} parent=31 // pred_check
          %p804 = pneg %p131
        $region46: #{tpu_custom_call.1} parent=31 // pred_check_branch
          %806 = sbr.rel (%p804) target = $region48
        $region47: #{tpu_custom_call.1} parent=31 // pred_region
          %s807 = smul.u32 32, %s25
          %s809 = ssub.s32 2048, 2048
          %810 = vsyncadd %s800, %s809
          %s811 = sadd.s32 %s26, %s807
          %s812 = smul.addr %s811, 64
          %s813 = scalar_lea.hbm %s3, %s812
          %s814 = sshll.u32 %s803, 4
          %s815 = int_to_ptr.vmem [resolvable:$true] %s814
          %820 = dma.vmem_to_hbm [thread:$0]  %s815, 2048, %s813, %s800, 64, 64, 4
        $region48: #{tpu_custom_call.1} parent=31 // pred_fallthru
          _
      $region32: #{tpu_custom_call.1} parent=5 // pred_fallthru
        _
      %p821 = scmp.le.s32.totalorder 2, %s16
      // Predicated region
      $region49: #{tpu_custom_call.1} parent=5 // pred_check
        %p822 = pneg %p821
      $region50: #{tpu_custom_call.1} parent=5 // pred_check_branch
        %824 = sbr.rel (%p822) target = $region52
      $region51: #{tpu_custom_call.1} parent=5 // pred_region
        %s825 = ssub.s32 %s16, 2
        // Predicated region
        $region53: #{tpu_custom_call.1} parent=51 // pred_check
          %p826 = pneg %p137
        $region54: #{tpu_custom_call.1} parent=51 // pred_check_branch
          %828 = sbr.rel (%p826) target = $region56
        $region55: #{tpu_custom_call.1} parent=51 // pred_region
          %s829 = sand.u32 %s122, 1
          %s830 = scalar_lea.sflag [#allocation4], %s829
          %s831 = sand.u32 %s122, 1
          %s832 = smul.addr %s831, 128
          %s833 = scalar_lea.vmem [#allocation8], %s832
          %834 = dma.done %s830, 2048
        $region56: #{tpu_custom_call.1} parent=51 // pred_fallthru
          _
      $region52: #{tpu_custom_call.1} parent=5 // pred_fallthru
        _
    $region6: #{tpu_custom_call.1} parent=1 // loop_footer
      %s20 = sadd.s32 1, %s16
    $region7: #{tpu_custom_call.1} parent=1 // loop_footer_branch
      %15 = sbr.rel target = $region3
    $region8: #{tpu_custom_call.1} parent=1 // loop_exit
      _
    %835 = vsyncpa [#allocation3], 1
    %s836 = scalar_lea.sflag [#allocation3], 1
    %837 = vsyncpa %s836, 1
    %838 = vsyncpa [#allocation6], 1
    %839 = vsyncpa [#allocation4], 1
    %s840 = scalar_lea.sflag [#allocation4], 1
    %841 = vsyncpa %s840, 1

</llo_original>
